<compile_context>
chip_gen: v7x
topology: tpu7x:2x2x1
jax: 0.10.0
libtpu: 0.0.40
codegen_flags: <defaults>
</compile_context>

<pallas_src>
import math
import numpy as np
import jax
import jax.numpy as jnp
from jax import lax
from jax.experimental import pallas as pl
from jax.experimental.pallas import tpu as pltpu


def _cdiv(a, b):
    return -(-a // b)


def make_istft_kernels(frame_len, frame_hop, num_fft=None):
    """Deterministic re-implementation of init_kernel() (sqrt_hann window).

    Returns Kr, Ki of shape (F, frame_len) with F = fft_size//2 + 1: the real
    and imaginary halves of the (fft_size+2, 1, frame_len) torch kernel.
    """
    fft_size = num_fft if num_fft else 2 ** math.ceil(math.log2(frame_len))
    n = np.arange(frame_len)
    # torch.hann_window is periodic: 0.5 - 0.5*cos(2*pi*n/N); sqrt_hann = **0.5
    window = np.sqrt(0.5 - 0.5 * np.cos(2.0 * np.pi * n / frame_len))
    S_ = 0.5 * (fft_size * fft_size / frame_hop) ** 0.5
    F = fft_size // 2 + 1
    t = np.arange(frame_len)[:, None]
    f = np.arange(F)[None, :]
    ang = 2.0 * np.pi * f * t / fft_size
    kr = ((np.cos(ang) / S_).T * window[None, :]).astype(np.float32)   # (F, L)
    ki = ((-np.sin(ang) / S_).T * window[None, :]).astype(np.float32)  # (F, L)
    return kr, ki


def _istft_kernel_factory(F, Ck, Tb, Lp, hop, R, mxu_dtype):
    npad = Ck - 2 * F

    def kernel(m_ref, p_ref, k_ref, o_ref, c_ref):
        n_idx = pl.program_id(0)
        t_idx = pl.program_id(1)

        # The output slab is resident across the frame-tile axis: zero it at
        # the first tile of every batch, accumulate afterwards.
        @pl.when(t_idx == 0)
        def _():
            o_ref[...] = jnp.zeros_like(o_ref)

        # The scratch persists across ALL grid steps -> zero its pad rows once
        # (the matching kernel rows are zero too, but 0*stale could be NaN).
        if npad:
            @pl.when((n_idx == 0) & (t_idx == 0))
            def _():
                c_ref[2 * F:, :] = jnp.zeros((npad, Tb), c_ref.dtype)

        m = m_ref[0]                                   # (F, Tb) f32
        ph = p_ref[0]                                  # (F, Tb) f32
        # Fused spectrum c = [m*cos(p); m*sin(p); 0-pad], packed contiguously.
        c_ref[0:F, :] = m * jnp.cos(ph)
        c_ref[F:2 * F, :] = m * jnp.sin(ph)

        # One fused MXU matmul, contracting the (sublane-exact) Ck axis:
        #   frames[t, l] = sum_g c[g, t] * K[g, l]
        lhs = c_ref[...].astype(mxu_dtype)             # bf16 operands, f32 acc
        frames = lax.dot_general(
            lhs, k_ref[...],
            dimension_numbers=(((0,), (0,)), ((), ())),
            preferred_element_type=jnp.float32)        # (Tb, Lp)

        # Overlap-add: R read-add-write passes directly into the resident
        # output ref (no big live accumulator, no dynamic_update_slice).
        t0 = t_idx * Tb
        for r in range(R):                             # R = Lp // hop, small
            start = t0 + r
            if Tb % 8 == 0 and r % 8 == 0:
                start = pl.multiple_of(start, 8)       # aligned-sublane hint
            rows = pl.ds(start, Tb)
            o_ref[0, rows, :] = o_ref[0, rows, :] + frames[:, r * hop:(r + 1) * hop]

    return kernel


def istft(m, p, kr, ki, frame_hop, *, squeeze=False,
          mxu_dtype=jnp.bfloat16, tb_target=256):
    """m, p: (N, F, T) [or (F, T)] float32 -> s: (N, 1, S), S = (T-1)*hop + L."""
    m = jnp.asarray(m, jnp.float32)
    p = jnp.asarray(p, jnp.float32)
    if m.ndim == 2:
        m, p = m[None], p[None]
    N, F, T = m.shape
    kr = np.asarray(kr, np.float32)
    ki = np.asarray(ki, np.float32)
    L = int(kr.shape[1])
    hop = int(frame_hop)
    R = _cdiv(L, hop)
    Lp = R * hop                     # frame length padded to a hop multiple
    S = (T - 1) * hop + L

    # ---- frame-tile size -------------------------------------------------
    if T <= tb_target:
        Tb = T                       # single tile: block last dim == full dim
    else:
        Tb = 128 * max(1, tb_target // 128)   # multi-tile: lane-dense blocks
    nT = _cdiv(T, Tb)
    Tp = nT * Tb
    if Tp != T:                      # zero frames contribute exact zeros
        m = jnp.pad(m, ((0, 0), (0, 0), (0, Tp - T)))
        p = jnp.pad(p, ((0, 0), (0, 0), (0, Tp - T)))
    Up = Tp + R - 1                  # output slab rows (hop samples per row)

    # ---- pack [Kr; Ki] with one zero end pad so the contraction dim has no
    # physically-padded (stale-VMEM) rows entering the MXU -------------------
    k_bytes = jnp.dtype(mxu_dtype).itemsize
    sub = 8 * max(1, 4 // k_bytes)            # sublane packing granule
    Ck = 2 * F + ((-2 * F) % sub)
    Kp_np = np.zeros((Ck, Lp), np.float32)
    Kp_np[:F, :L] = kr
    Kp_np[F:2 * F, :L] = ki
    if np.isnan(Kp_np).any():                 # mirrors STFTBase.check_nan()
        raise RuntimeError('detect nan in STFT kernels')
    Kp = jnp.asarray(Kp_np, dtype=mxu_dtype)

    kernel = _istft_kernel_factory(F, Ck, Tb, Lp, hop, R, mxu_dtype)

    # ---- VMEM budget from the actual block working set --------------------
    need = (2 * 2 * F * Tb * 4         # m & p blocks (double-buffered)
            + 2 * Ck * Lp * k_bytes    # packed kernel constant (double-buffered;
                                       #   pl.Buffered(1) would save one copy)
            + 2 * Up * hop * 4         # resident output block (+ writeback buf)
            + Ck * Tb * (4 + k_bytes)  # f32 spectrum scratch + MXU-dtype cast
            + Tb * Lp * 4              # frames (matmul result)
            + 2 * Tb * hop * 4)        # OLA chunk temporaries
    try:
        phys = pltpu.get_tpu_info().vmem_capacity_bytes
    except Exception:
        phys = 64 * 1024 * 1024        # conservative (v7x-sized) fallback
    vmem_limit = int(min(max(2 * need, 32 * 1024 * 1024), int(phys * 0.85)))
    # TODO(synk): for extremely long signals the resident (Up, hop) slab itself
    # would need an output-tile axis with an R-1-row seam; not needed here.

    out = pl.pallas_call(
        kernel,
        out_shape=jax.ShapeDtypeStruct((N, Up, hop), jnp.float32),
        grid=(N, nT),
        in_specs=[
            pl.BlockSpec((1, F, Tb), lambda n, t: (n, 0, t)),
            pl.BlockSpec((1, F, Tb), lambda n, t: (n, 0, t)),
            pl.BlockSpec((Ck, Lp), lambda n, t: (0, 0)),
        ],
        out_specs=pl.BlockSpec((1, Up, hop), lambda n, t: (n, 0, 0)),
        scratch_shapes=[pltpu.VMEM((Ck, Tb), jnp.float32)],
        compiler_params=pltpu.CompilerParams(
            dimension_semantics=("parallel", "arbitrary"),
            vmem_limit_bytes=vmem_limit),
    )(m, p, Kp)

    # Rows of the (Up, hop) slab are contiguous hop-sample chunks of the wave.
    s = out.reshape(N, 1, Up * hop)[:, :, :S]
    if squeeze:
        s = jnp.squeeze(s)
    return s


if __name__ == "__main__":
    frame_len, frame_hop = 16, 8
    fft_size = 2 ** math.ceil(math.log2(frame_len))
    F = fft_size // 2 + 1            # 9
    N, T = 2, 8

    kr, ki = make_istft_kernels(frame_len, frame_hop)

    key = jax.random.PRNGKey(0)
    k1, k2 = jax.random.split(key)
    m = jax.random.uniform(k1, (N, F, T), dtype=jnp.float32)               # magnitude
    p = jax.random.uniform(k2, (N, F, T), dtype=jnp.float32,
                           minval=-math.pi, maxval=math.pi)                # phase

    # f32 MXU path: exact semantics of the PyTorch module (tight check).
    s32 = jax.block_until_ready(istft(m, p, kr, ki, frame_hop,
                                      mxu_dtype=jnp.float32))
    # bf16 MXU path (production default per the perf review): loose check.
    sbf = jax.block_until_ready(istft(m, p, kr, ki, frame_hop,
                                      mxu_dtype=jnp.bfloat16))

    # Plain-JAX reference of conv_transpose1d(cat([m cos p, m sin p]), K, stride=hop).
    krj, kij = jnp.asarray(kr), jnp.asarray(ki)
    r = m * jnp.cos(p)
    i = m * jnp.sin(p)
    frames = (jnp.einsum('nft,fl->ntl', r, krj)
              + jnp.einsum('nft,fl->ntl', i, kij))                         # (N, T, L)
    S = (T - 1) * frame_hop + frame_len
    ref = jnp.zeros((N, 1, S), jnp.float32)
    for t in range(T):
        ref = ref.at[:, 0, t * frame_hop:t * frame_hop + frame_len].add(frames[:, t, :])

    assert s32.shape == (N, 1, S)
    assert jnp.allclose(s32, ref, atol=1e-4, rtol=1e-4), \
        float(jnp.max(jnp.abs(s32 - ref)))
    # bf16 operands (f32 accumulation): ~1e-2-level error on O(1) outputs.
    assert jnp.allclose(sbf, ref, atol=1e-1, rtol=1e-1), \
        float(jnp.max(jnp.abs(sbf - ref)))
    print("KERNEL_OK")
</pallas_src>

<mosaic_0001>
module attributes {stable_mosaic.version = 11 : i64} {
  func.func @kernel(%arg0: i32, %arg1: i32, %arg2: memref<1x9x8xf32, #tpu.memory_space<vmem>>, %arg3: memref<1x9x8xf32, #tpu.memory_space<vmem>>, %arg4: memref<24x16xf32, #tpu.memory_space<vmem>>, %arg5: memref<1x9x8xf32, #tpu.memory_space<vmem>>, %arg6: memref<24x8xf32, #tpu.memory_space<vmem>>) attributes {dimension_semantics = [#tpu.dimension_semantics<parallel>, #tpu.dimension_semantics<arbitrary>], iteration_bounds = array<i64: 2, 1>, scalar_prefetch = 0 : i64, scratch_operands = 1 : i64, tpu.core_type = #tpu.core_type<tc>, window_params = [{transform_indices = @transform_0, window_bounds = array<i64: 1, 9, 8>}, {transform_indices = @transform_1, window_bounds = array<i64: 1, 9, 8>}, {pipeline_mode = #tpu.pipeline_mode<synchronous>, transform_indices = @transform_2, window_bounds = array<i64: 24, 16>}, {transform_indices = @transform_3, window_bounds = array<i64: 1, 9, 8>}]} {
    %c0_i32 = arith.constant 0 : i32
    %0 = arith.cmpi eq, %arg1, %c0_i32 : i32
    %1 = arith.extui %0 : i1 to i32
    %c0_i32_0 = arith.constant 0 : i32
    %2 = arith.cmpi ne, %1, %c0_i32_0 : i32
    scf.if %2 {
      %cst_25 = arith.constant 0.000000e+00 : f32
      %43 = vector.broadcast %cst_25 : f32 to vector<1x9x8xf32>
      %c0_26 = arith.constant 0 : index
      %c0_27 = arith.constant 0 : index
      %c0_28 = arith.constant 0 : index
      %44 = vector.load %arg5[%c0_26, %c0_27, %c0_28] : memref<1x9x8xf32, #tpu.memory_space<vmem>>, vector<1x9x8xf32>
      tpu.vector_store %arg5[%c0_26, %c0_27, %c0_28], %43 {strides = array<i32>} : memref<1x9x8xf32, #tpu.memory_space<vmem>>, vector<1x9x8xf32>,
    } else {
    }
    %c0_i32_1 = arith.constant 0 : i32
    %3 = arith.cmpi eq, %arg0, %c0_i32_1 : i32
    %c0_i32_2 = arith.constant 0 : i32
    %4 = arith.cmpi eq, %arg1, %c0_i32_2 : i32
    %5 = arith.andi %3, %4 : i1
    %6 = arith.extui %5 : i1 to i32
    %c0_i32_3 = arith.constant 0 : i32
    %7 = arith.cmpi ne, %6, %c0_i32_3 : i32
    scf.if %7 {
      %cst_25 = arith.constant 0.000000e+00 : f32
      %43 = vector.broadcast %cst_25 : f32 to vector<6x8xf32>
      %c18 = arith.constant 18 : index
      %c0_26 = arith.constant 0 : index
      %44 = vector.load %arg6[%c18, %c0_26] : memref<24x8xf32, #tpu.memory_space<vmem>>, vector<6x8xf32>
      tpu.vector_store %arg6[%c18, %c0_26], %43 {strides = array<i32>} : memref<24x8xf32, #tpu.memory_space<vmem>>, vector<6x8xf32>,
    } else {
    }
    %c0 = arith.constant 0 : index
    %c0_4 = arith.constant 0 : index
    %c0_5 = arith.constant 0 : index
    %8 = vector.load %arg2[%c0, %c0_4, %c0_5] : memref<1x9x8xf32, #tpu.memory_space<vmem>>, vector<1x9x8xf32>
    %9 = vector.shape_cast %8 : vector<1x9x8xf32> to vector<9x8xf32>
    %c0_6 = arith.constant 0 : index
    %c0_7 = arith.constant 0 : index
    %c0_8 = arith.constant 0 : index
    %10 = vector.load %arg3[%c0_6, %c0_7, %c0_8] : memref<1x9x8xf32, #tpu.memory_space<vmem>>, vector<1x9x8xf32>
    %11 = vector.shape_cast %10 : vector<1x9x8xf32> to vector<9x8xf32>
    %12 = math.cos %11 : vector<9x8xf32>
    %13 = arith.mulf %9, %12 : vector<9x8xf32>
    %c0_9 = arith.constant 0 : index
    %c0_10 = arith.constant 0 : index
    %14 = vector.load %arg6[%c0_9, %c0_10] : memref<24x8xf32, #tpu.memory_space<vmem>>, vector<9x8xf32>
    tpu.vector_store %arg6[%c0_9, %c0_10], %13 {strides = array<i32>} : memref<24x8xf32, #tpu.memory_space<vmem>>, vector<9x8xf32>,
    %15 = math.sin %11 : vector<9x8xf32>
    %16 = arith.mulf %9, %15 : vector<9x8xf32>
    %c9 = arith.constant 9 : index
    %c0_11 = arith.constant 0 : index
    %17 = vector.load %arg6[%c9, %c0_11] : memref<24x8xf32, #tpu.memory_space<vmem>>, vector<9x8xf32>
    tpu.vector_store %arg6[%c9, %c0_11], %16 {strides = array<i32>} : memref<24x8xf32, #tpu.memory_space<vmem>>, vector<9x8xf32>,
    %c0_12 = arith.constant 0 : index
    %c0_13 = arith.constant 0 : index
    %18 = vector.load %arg6[%c0_12, %c0_13] : memref<24x8xf32, #tpu.memory_space<vmem>>, vector<24x8xf32>
    %c0_14 = arith.constant 0 : index
    %c0_15 = arith.constant 0 : index
    %19 = vector.load %arg4[%c0_14, %c0_15] : memref<24x16xf32, #tpu.memory_space<vmem>>, vector<24x16xf32>
    %cst = arith.constant dense<0.000000e+00> : vector<8x16xf32>
    %20 = tpu.matmul %18, %19, %cst {dimension_numbers = #tpu.dot_dimension_numbers<[0], [0], [1], [1], [0, 1, 1, 1], [], []>} : vector<24x8xf32>, vector<24x16xf32>, vector<8x16xf32> -> vector<8x16xf32>
    %c8_i32 = arith.constant 8 : i32
    %21 = arith.muli %arg1, %c8_i32 : i32
    %c0_i32_16 = arith.constant 0 : i32
    %22 = arith.addi %21, %c0_i32_16 : i32
    %23 = tpu.assume_multiple %22, 8 : i32
    %c0_17 = arith.constant 0 : index
    %24 = arith.index_cast %23 : i32 to index
    %c0_18 = arith.constant 0 : index
    %25 = vector.load %arg5[%c0_17, %24, %c0_18] : memref<1x9x8xf32, #tpu.memory_space<vmem>>, vector<1x8x8xf32>
    %26 = vector.shape_cast %25 : vector<1x8x8xf32> to vector<8x8xf32>
    %27 = vector.extract_strided_slice %20 {offsets = [0, 0], sizes = [8, 8], strides = [1, 1]} : vector<8x16xf32> to vector<8x8xf32>
    %28 = arith.addf %26, %27 : vector<8x8xf32>
    %c0_19 = arith.constant 0 : index
    %29 = arith.index_cast %23 : i32 to index
    %c0_20 = arith.constant 0 : index
    %30 = vector.load %arg5[%c0_19, %29, %c0_20] : memref<1x9x8xf32, #tpu.memory_space<vmem>>, vector<1x8x8xf32>
    %31 = vector.shape_cast %30 : vector<1x8x8xf32> to vector<8x8xf32>
    %32 = vector.shape_cast %28 : vector<8x8xf32> to vector<1x8x8xf32>
    tpu.vector_store %arg5[%c0_19, %29, %c0_20], %32 {strides = array<i32>} : memref<1x9x8xf32, #tpu.memory_space<vmem>>, vector<1x8x8xf32>,
    %c1_i32 = arith.constant 1 : i32
    %33 = arith.addi %21, %c1_i32 : i32
    %c0_21 = arith.constant 0 : index
    %34 = arith.index_cast %33 : i32 to index
    %c0_22 = arith.constant 0 : index
    %35 = vector.load %arg5[%c0_21, %34, %c0_22] : memref<1x9x8xf32, #tpu.memory_space<vmem>>, vector<1x8x8xf32>
    %36 = vector.shape_cast %35 : vector<1x8x8xf32> to vector<8x8xf32>
    %37 = vector.extract_strided_slice %20 {offsets = [0, 8], sizes = [8, 8], strides = [1, 1]} : vector<8x16xf32> to vector<8x8xf32>
    %38 = arith.addf %36, %37 : vector<8x8xf32>
    %c0_23 = arith.constant 0 : index
    %39 = arith.index_cast %33 : i32 to index
    %c0_24 = arith.constant 0 : index
    %40 = vector.load %arg5[%c0_23, %39, %c0_24] : memref<1x9x8xf32, #tpu.memory_space<vmem>>, vector<1x8x8xf32>
    %41 = vector.shape_cast %40 : vector<1x8x8xf32> to vector<8x8xf32>
    %42 = vector.shape_cast %38 : vector<8x8xf32> to vector<1x8x8xf32>
    tpu.vector_store %arg5[%c0_23, %39, %c0_24], %42 {strides = array<i32>} : memref<1x9x8xf32, #tpu.memory_space<vmem>>, vector<1x8x8xf32>,
    return
  }
  func.func @transform_0(%arg0: i32, %arg1: i32) -> (i32, i32, i32) {
    %c0_i32 = arith.constant 0 : i32
    %c0_i32_0 = arith.constant 0 : i32
    return %arg0, %c0_i32, %arg1 : i32, i32, i32
  }
  func.func @transform_1(%arg0: i32, %arg1: i32) -> (i32, i32, i32) {
    %c0_i32 = arith.constant 0 : i32
    %c0_i32_0 = arith.constant 0 : i32
    return %arg0, %c0_i32, %arg1 : i32, i32, i32
  }
  func.func @transform_2(%arg0: i32, %arg1: i32) -> (i32, i32) {
    %c0_i32 = arith.constant 0 : i32
    %c0_i32_0 = arith.constant 0 : i32
    %c0_i32_1 = arith.constant 0 : i32
    return %c0_i32, %c0_i32_0 : i32, i32
  }
  func.func @transform_3(%arg0: i32, %arg1: i32) -> (i32, i32, i32) {
    %c0_i32 = arith.constant 0 : i32
    %c0_i32_0 = arith.constant 0 : i32
    %c0_i32_1 = arith.constant 0 : i32
    return %arg0, %c0_i32, %c0_i32_0 : i32, i32, i32
  }
}

</mosaic_0001>

<llo_original>
// kernel: tpu_custom_call.1
$region0: #{tpu_custom_call.1}
  #allocation0 [shape = 'u32[]', space=smem, size = 0x4, offset = 0x4, fixed_abs, tag = 'smem constant byte address 0x4 - core index']
  #allocation1 [shape = 'u32[144,128]{1,0:T(1,128)}', space=vmem, size = 0x12000, scoped, tag = 'internal scratch']
  #allocation2 [shape = 'f32[24,8]{1,0:T(8,128)}', space=vmem, size = 0x3000, scoped, tag = 'scratch operand']
  %s0 = inlined_call_operand.vmem [shape: f32[2,9,8], index: 0, kind: input, shape index: {}]
  %s1 = inlined_call_operand.vmem [shape: f32[2,9,8], index: 1, kind: input, shape index: {}]
  %s2 = inlined_call_operand.vmem [shape: f32[24,16], index: 2, kind: input, shape index: {}]
  %s3 = inlined_call_operand.vmem [shape: f32[2,9,8], index: 3, kind: output, shape index: {}]
  %s4 = sld [smem:[#allocation0]]
  $region53: #{tpu_custom_call.1} parent=0
    _
  %s6 = ssub.s32 1, %s4
  %s7 = scalar_select 0, %s6, %s4
  loop: start=0, step=1, limit=4
  $region2: #{tpu_custom_call.1} parent=0 // loop_pre_header
    _
  $region3: #{tpu_custom_call.1} parent=0 // loop_header
    %s9 = sphi 0, %s13
    %p10 = scmp.ge.s32.totalorder %s9, 4
    %s16 = sphi 0, %s28
    %s17 = sphi 0, %s24
    %s18 = sphi 0, %s16
    %s19 = sphi 0, %s17
    %s20 = sphi 0, %s18
    %s21 = sphi 0, %s19
    %s33 = sphi 0, %s35
    %s36 = sphi 0, %s33
    %s37 = sphi 0, %s36
    %s53 = sphi 0, %s37
    %s61 = sphi 0, %s63
    %s64 = sphi 0, %s61
    %s65 = sphi 0, %s64
    %s81 = sphi 0, %s65
    %s85 = sphi 0, %s85
    %s87 = sphi 0, %s85
    %s88 = sphi 0, %s87
    %s102 = sphi 0, %s88
    %s108 = sphi 0, %s110
    %s111 = sphi 0, %s108
    %s112 = sphi 0, %s111
    %s128 = sphi 0, %s112
  $region4: #{tpu_custom_call.1} parent=0 // loop_header_branch
    %12 = sbr.rel (%p10) target = $region8
  $region5: #{tpu_custom_call.1} parent=0 // loop_body
    %s14 = ssub.s32 %s9, 1
    %s15 = ssub.s32 %s9, 2
    %s22 = sadd.s32 1, %s17
    %p23 = scmp.ge.s32.totalorder %s22, 1
    %s24 = scalar_select %p23, 0, %s22
    %s25 = sadd.s32 1, %s16
    %s26 = scalar_select %p23, %s25, %s16
    %p27 = scmp.ge.s32.totalorder %s26, 2
    %s28 = scalar_select %p27, 0, %s26
    %s29 = ssub.s32 %s16, %s28
    %s30 = ssub.s32 %s17, %s24
    %s31 = sor.u32 %s29, %s30
    %p32 = scmp.eq.s32.totalorder %s31, 0
    %s34 = sadd.s32 %s33, 1
    %s35 = scalar_select %p32, %s33, %s34
    %p38 = pneg %p32
    %p39 = scmp.eq.s32.totalorder %s9, 1
    %p40 = por %p38, %p39
    %p41 = scmp.ne.s32.totalorder %s33, %s36
    %p42 = scmp.eq.s32.totalorder %s9, 0
    %p43 = por %p41, %p42
    %p44 = scmp.ne.s32.totalorder %s33, %s36
    %p45 = scmp.eq.s32.totalorder %s14, 1
    %p46 = por %p44, %p45
    %p47 = scmp.ne.s32.totalorder %s36, %s37
    %p48 = scmp.eq.s32.totalorder %s14, 0
    %p49 = por %p47, %p48
    %p50 = scmp.ne.s32.totalorder %s36, %s37
    %p51 = scmp.eq.s32.totalorder %s15, 1
    %p52 = por %p50, %p51
    %p54 = scmp.ne.s32.totalorder %s37, %s53
    %p55 = scmp.eq.s32.totalorder %s15, 0
    %p56 = por %p54, %p55
    %s57 = ssub.s32 %s16, %s28
    %s58 = ssub.s32 %s17, %s24
    %s59 = sor.u32 %s57, %s58
    %p60 = scmp.eq.s32.totalorder %s59, 0
    %s62 = sadd.s32 %s61, 1
    %s63 = scalar_select %p60, %s61, %s62
    %p66 = pneg %p60
    %p67 = scmp.eq.s32.totalorder %s9, 1
    %p68 = por %p66, %p67
    %p69 = scmp.ne.s32.totalorder %s61, %s64
    %p70 = scmp.eq.s32.totalorder %s9, 0
    %p71 = por %p69, %p70
    %p72 = scmp.ne.s32.totalorder %s61, %s64
    %p73 = scmp.eq.s32.totalorder %s14, 1
    %p74 = por %p72, %p73
    %p75 = scmp.ne.s32.totalorder %s64, %s65
    %p76 = scmp.eq.s32.totalorder %s14, 0
    %p77 = por %p75, %p76
    %p78 = scmp.ne.s32.totalorder %s64, %s65
    %p79 = scmp.eq.s32.totalorder %s15, 1
    %p80 = por %p78, %p79
    %p82 = scmp.ne.s32.totalorder %s65, %s81
    %p83 = scmp.eq.s32.totalorder %s15, 0
    %p84 = por %p82, %p83
    %s86 = sadd.s32 %s85, 1
    %p89 = scmp.eq.s32.totalorder %s9, 1
    %p90 = scmp.ne.s32.totalorder %s85, %s87
    %p91 = scmp.eq.s32.totalorder %s9, 0
    %p92 = por %p90, %p91
    %p93 = scmp.ne.s32.totalorder %s85, %s87
    %p94 = scmp.eq.s32.totalorder %s14, 1
    %p95 = por %p93, %p94
    %p96 = scmp.ne.s32.totalorder %s87, %s88
    %p97 = scmp.eq.s32.totalorder %s14, 0
    %p98 = por %p96, %p97
    %p99 = scmp.ne.s32.totalorder %s87, %s88
    %p100 = scmp.eq.s32.totalorder %s15, 1
    %p101 = por %p99, %p100
    %p103 = scmp.ne.s32.totalorder %s88, %s102
    %p104 = scmp.eq.s32.totalorder %s15, 0
    %p105 = por %p103, %p104
    %s106 = ssub.s32 %s16, %s28
    %p107 = scmp.eq.s32.totalorder %s106, 0
    %s109 = sadd.s32 %s108, 1
    %s110 = scalar_select %p107, %s108, %s109
    %p113 = pneg %p107
    %p114 = scmp.eq.s32.totalorder %s9, 1
    %p115 = por %p113, %p114
    %p116 = scmp.ne.s32.totalorder %s108, %s111
    %p117 = scmp.eq.s32.totalorder %s9, 0
    %p118 = por %p116, %p117
    %p119 = scmp.ne.s32.totalorder %s108, %s111
    %p120 = scmp.eq.s32.totalorder %s14, 1
    %p121 = por %p119, %p120
    %p122 = scmp.ne.s32.totalorder %s111, %s112
    %p123 = scmp.eq.s32.totalorder %s14, 0
    %p124 = por %p122, %p123
    %p125 = scmp.ne.s32.totalorder %s111, %s112
    %p126 = scmp.eq.s32.totalorder %s15, 1
    %p127 = por %p125, %p126
    %p129 = scmp.ne.s32.totalorder %s112, %s128
    %p130 = scmp.eq.s32.totalorder %s15, 0
    %p131 = por %p129, %p130
    %p132 = scmp.le.s32.totalorder 1, %s9
    %p133 = scmp.lt.s32.totalorder %s9, 3
    %p134 = pnand %p132, %p133
    %p135 = pneg %p134
    // Predicated region
    $region9: #{tpu_custom_call.1} parent=5 // pred_check
      _
    $region10: #{tpu_custom_call.1} parent=5 // pred_check_branch
      %137 = sbr.rel (%p134) target = $region12
    $region11: #{tpu_custom_call.1} parent=5 // pred_region
      %s138 = ssub.s32 %s9, 1
      // Predicated region
      $region13: #{tpu_custom_call.1} parent=11 // pred_check
        %p139 = pneg %p98
      $region14: #{tpu_custom_call.1} parent=11 // pred_check_branch
        %141 = sbr.rel (%p139) target = $region16
      $region15: #{tpu_custom_call.1} parent=11 // pred_region
        _
      $region16: #{tpu_custom_call.1} parent=11 // pred_fallthru
        _
    $region12: #{tpu_custom_call.1} parent=5 // pred_fallthru
      _
    %p142 = scmp.lt.s32.totalorder %s9, 2
    // Predicated region
    $region17: #{tpu_custom_call.1} parent=5 // pred_check
      %p143 = pneg %p142
    $region18: #{tpu_custom_call.1} parent=5 // pred_check_branch
      %145 = sbr.rel (%p143) target = $region20
    $region19: #{tpu_custom_call.1} parent=5 // pred_region
      // Predicated region
      $region21: #{tpu_custom_call.1} parent=19 // pred_check
        %p146 = pneg %p43
      $region22: #{tpu_custom_call.1} parent=19 // pred_check_branch
        %148 = sbr.rel (%p146) target = $region24
      $region23: #{tpu_custom_call.1} parent=19 // pred_region
        %p149 = scmp.lt.s32.totalorder %s16, 1
        %s150 = scalar_select %p149, %s16, 1
        %p151 = scmp.lt.s32.totalorder %s17, 0
        %s152 = scalar_select %p151, %s17, 0
        %s153 = smul.addr %s150, 2
        %s154 = sadd.s32 %s152, %s153
        %s155 = smul.addr %s154, 8
        %s156 = scalar_lea.vmem %s0, %s155
      $region24: #{tpu_custom_call.1} parent=19 // pred_fallthru
        _
      // Predicated region
      $region25: #{tpu_custom_call.1} parent=19 // pred_check
        %p157 = pneg %p71
      $region26: #{tpu_custom_call.1} parent=19 // pred_check_branch
        %159 = sbr.rel (%p157) target = $region28
      $region27: #{tpu_custom_call.1} parent=19 // pred_region
        %p160 = scmp.lt.s32.totalorder %s16, 1
        %s161 = scalar_select %p160, %s16, 1
        %p162 = scmp.lt.s32.totalorder %s17, 0
        %s163 = scalar_select %p162, %s17, 0
        %s164 = smul.addr %s161, 2
        %s165 = sadd.s32 %s163, %s164
        %s166 = smul.addr %s165, 8
        %s167 = scalar_lea.vmem %s1, %s166
      $region28: #{tpu_custom_call.1} parent=19 // pred_fallthru
        _
    $region20: #{tpu_custom_call.1} parent=5 // pred_fallthru
      _
    %p168 = scmp.le.s32.totalorder 1, %s9
    %p169 = scmp.lt.s32.totalorder %s9, 3
    %p170 = pnand %p168, %p169
    %p171 = pneg %p170
    // Predicated region
    $region29: #{tpu_custom_call.1} parent=5 // pred_check
      _
    $region30: #{tpu_custom_call.1} parent=5 // pred_check_branch
      %173 = sbr.rel (%p170) target = $region32
    $region31: #{tpu_custom_call.1} parent=5 // pred_region
      %s174 = ssub.s32 %s9, 1
      %p175 = scmp.lt.s32.totalorder %s18, 1
      %s176 = scalar_select %p175, %s18, 1
      %p177 = scmp.lt.s32.totalorder %s19, 0
      %s178 = scalar_select %p177, %s19, 0
      %s179 = smul.addr %s176, 2
      %s180 = sadd.s32 %s178, %s179
      %s181 = smul.addr %s180, 8
      %s182 = scalar_lea.vmem %s0, %s181
      %p183 = pneg %p49
      %p184 = pneg %p46
      %p185 = scmp.lt.s32.totalorder %s18, 1
      %s186 = scalar_select %p185, %s18, 1
      %p187 = scmp.lt.s32.totalorder %s19, 0
      %s188 = scalar_select %p187, %s19, 0
      %s189 = smul.addr %s186, 2
      %s190 = sadd.s32 %s188, %s189
      %s191 = smul.addr %s190, 8
      %s192 = scalar_lea.vmem %s1, %s191
      %p193 = pneg %p77
      %p194 = pneg %p74
      %p195 = pneg %p98
      %p196 = pneg %p95
      %p197 = pneg %p124
      %p198 = pneg %p121
      %p199 = scmp.lt.s32.totalorder %s18, 1
      %s200 = scalar_select %p199, %s18, 1
      %s201 = smul.addr %s200, 2
      %s202 = smul.addr %s201, 8
      %s203 = scalar_lea.vmem %s3, %s202
      %p204 = scmp.lt.s32.totalorder %s18, 1
      %s205 = scalar_select %p204, %s18, 1
      %p206 = scmp.lt.s32.totalorder %s19, 0
      %s207 = scalar_select %p206, %s19, 0
      %s208 = smul.addr %s205, 2
      %s209 = sadd.s32 %s207, %s208
      %s210 = smul.addr %s209, 8
      %s211 = scalar_lea.vmem %s0, %s210
      %p212 = scmp.lt.s32.totalorder %s18, 1
      %s213 = scalar_select %p212, %s18, 1
      %p214 = scmp.lt.s32.totalorder %s19, 0
      %s215 = scalar_select %p214, %s19, 0
      %s216 = smul.addr %s213, 2
      %s217 = sadd.s32 %s215, %s216
      %s218 = smul.addr %s217, 8
      %s219 = scalar_lea.vmem %s1, %s218
      %p220 = scmp.lt.s32.totalorder %s18, 1
      %s221 = scalar_select %p220, %s18, 1
      %s222 = smul.addr %s221, 2
      %s223 = smul.addr %s222, 8
      %s224 = scalar_lea.vmem %s3, %s223
      %p225 = scmp.eq.s32.totalorder %s19, 0
      // Predicated region
      $region33: #{tpu_custom_call.1} parent=31 // pred_check
        %p226 = pneg %p225
      $region34: #{tpu_custom_call.1} parent=31 // pred_check_branch
        %228 = sbr.rel (%p226) target = $region36
      $region35: #{tpu_custom_call.1} parent=31 // pred_region
        %vm229 = vcmask 64512
        %230 = vst.msk [vmem:[%s224] sm:$0xff] %vm229, 0.0
        %vm231 = vcmask 57344
        %232 = vst.msk [vmem:[%s224 + $0x8] sm:$0x1] %vm231, 0.0
      $region36: #{tpu_custom_call.1} parent=31 // pred_fallthru
        _
      %p233 = scmp.eq.s32.totalorder %s18, 0
      %p234 = pnand %p233, %p225
      %p235 = pneg %p234
      // Predicated region
      $region37: #{tpu_custom_call.1} parent=31 // pred_check
        _
      $region38: #{tpu_custom_call.1} parent=31 // pred_check_branch
        %237 = sbr.rel (%p234) target = $region40
      $region39: #{tpu_custom_call.1} parent=31 // pred_region
        %vm238 = vcmask 62464
        %239 = vst.msk [vmem:[#allocation2 + $0x12] sm:$0x3f] %vm238, 0.0
      $region40: #{tpu_custom_call.1} parent=31 // pred_fallthru
        _
      %v240 = vld [vmem:[%s211] sm:$0xff]
      %v241 = vld [vmem:[%s211 + $0x8] sm:$0x1]
      %v242 = vld [vmem:[%s219] sm:$0xff]
      %v243 = vld [vmem:[%s219 + $0x8] sm:$0x1]
      %v244 = vand.u32 2147483647, %v242
      %vm245 = vcmp.le.f32.partialorder %v244, 0.7853982
      %vm246 = vcmp.lt.s32.totalorder %v242, 0
      %v247 = vand.u32 %v242, 2139095040
      %v248 = vshrl.u32 %v247, 23
      %v249 = vsub.s32 %v248, 127
      %v250 = vand.u32 2147483647, %v242
      %v251 = vand.u32 %v250, 8388607
      %v252 = vor.u32 %v251, 8388608
      %v253 = vsub.s32 0, %v252
      %v254 = vadd.s32 %v249, 1
      %vm255 = vcmp.gt.s32.totalorder %v254, 0
      %v256 = vsel %vm255, %v254, 0
      %v257 = vshrl.u32 %v256, 5
      %v258 = vand.u32 %v256, 31
      %v259 = vsub.s32 32, %v258
      %v260 = vshrl.u32 683565275, %v259
      %v261 = vshll.u32 683565275, %v258
      %v262 = vshrl.u32 2475754826, %v259
      %v263 = vor.u32 %v261, %v262
      %v264 = vshll.u32 2475754826, %v258
      %v265 = vshrl.u32 2131351028, %v259
      %v266 = vor.u32 %v264, %v265
      %v267 = vshll.u32 2131351028, %v258
      %v268 = vshrl.u32 2102212464, %v259
      %v269 = vor.u32 %v267, %v268
      %v270 = vshll.u32 2102212464, %v258
      %v271 = vshrl.u32 920167782, %v259
      %v272 = vor.u32 %v270, %v271
      %v273 = vshll.u32 920167782, %v258
      %v274 = vshrl.u32 1326507024, %v259
      %v275 = vor.u32 %v273, %v274
      %vm276 = vcmp.lt.s32.totalorder %v257, 1
      %vm277 = vcmp.lt.s32.totalorder %v257, 2
      %vm278 = vcmp.lt.s32.totalorder %v257, 3
      %vm279 = vcmp.lt.s32.totalorder %v257, 4
      %v280 = vsel %vm276, %v260, %v263
      %v281 = vsel %vm279, %v269, 2102212464
      %v282 = vsel %vm278, %v266, %v281
      %v283 = vsel %vm277, %v280, %v282
      %v284 = vsel %vm276, %v263, %v266
      %v285 = vsel %vm279, %v272, 920167782
      %v286 = vsel %vm278, %v269, %v285
      %v287 = vsel %vm277, %v284, %v286
      %v288 = vsel %vm276, %v266, %v269
      %v289 = vsel %vm279, %v275, 1326507024
      %v290 = vsel %vm278, %v272, %v289
      %v291 = vsel %vm277, %v288, %v290
      %v292 = vshll.u32 %v252, 8
      %v293 = vmul.u32.u64.compose %v292, %v291
      %v294 = vextract.low.u32 %v293
      %v295 = vextract.high.u32 %v293
      %v296 = vmul.u32.u64.compose %v292, %v287
      %v297 = vextract.low.u32 %v296
      %v298 = vextract.high.u32 %v296
      %v299 = vmul.u32 %v292, %v283
      %v300 = vadd.s32 %v295, %v297
      %vm301 = vc.u32 %v295, %v297
      %v302 = vadd.s32 %v298, 1
      %v303 = vsel %vm301, %v302, %v298
      %v304 = vadd.s32 %v299, %v303
      %v305 = vadd.s32 %v304, 536870912
      %v306 = vshrl.u32 %v305, 30
      %v307 = vshll.u32 %v306, 30
      %v308 = vsub.s32 %v304, %v307
      %vm309 = vcmp.lt.s32.totalorder %v308, 0
      %v310 = vsub.s32 0, %v308
      %v311 = vsel %vm309, %v310, %v308
      %v312 = vclz %v311
      %v313 = vsub.s32 %v312, 2
      %vm314 = vcmp.gt.s32.totalorder 0, %v313
      %v315 = vsel %vm314, 0, %v313
      %v316 = vsub.s32 32, %v315
      %v317 = vshll.u32 %v308, %v315
      %v318 = vshrl.u32 %v300, %v316
      %v319 = vor.u32 %v317, %v318
      %v320 = vsub.s32 4294967266, %v315
      %v321 = vadd.s32 %v320, 127
      %v322 = vshll.u32 %v321, 23
      %v323 = vor.u32 4788187, %v322
      %v324 = vand.u32 2147483647, %v323
      %v326 = vcvt.s32.f32 %v319
      %v327 = vmul.f32 %v326, %v324
      %v328 = vxor.u32 %v327, 2147483648
      %v329 = vsel %vm246, %v328, %v327
      %v330 = vsub.s32 4, %v306
      %v331 = vsel %vm246, %v330, %v306
      %v332 = vsel %vm245, %v242, %v329
      %v333 = vsel %vm245, 0, %v331
      %v334 = vcosq.f32.pop %v332
      %v335 = vsinq.f32.pop %v332
      %vm336 = vweird.f32 %v242
      %v337 = vand.u32 %v333, 3
      %vm338 = vcmp.lt.s32.totalorder %v337, 2
      %vm339 = vcmp.eq.s32.totalorder %v337, 0
      %v340 = vxor.u32 %v335, 2147483648
      %v341 = vsel %vm339, %v334, %v340
      %vm342 = vcmp.eq.s32.totalorder %v337, 2
      %v343 = vxor.u32 %v334, 2147483648
      %v344 = vsel %vm342, %v343, %v335
      %v345 = vsel %vm338, %v341, %v344
      %v346 = vsel %vm336, nan, %v345
      %v347 = vand.u32 2147483647, %v243
      %vm348 = vcmp.le.f32.partialorder %v347, 0.7853982
      %vm349 = vcmp.lt.s32.totalorder %v243, 0
      %v350 = vand.u32 %v243, 2139095040
      %v351 = vshrl.u32 %v350, 23
      %v352 = vsub.s32 %v351, 127
      %v353 = vand.u32 2147483647, %v243
      %v354 = vand.u32 %v353, 8388607
      %v355 = vor.u32 %v354, 8388608
      %v356 = vsub.s32 0, %v355
      %v357 = vadd.s32 %v352, 1
      %vm358 = vcmp.gt.s32.totalorder %v357, 0
      %v359 = vsel %vm358, %v357, 0
      %v360 = vshrl.u32 %v359, 5
      %v361 = vand.u32 %v359, 31
      %v362 = vsub.s32 32, %v361
      %v363 = vshrl.u32 683565275, %v362
      %v364 = vshll.u32 683565275, %v361
      %v365 = vshrl.u32 2475754826, %v362
      %v366 = vor.u32 %v364, %v365
      %v367 = vshll.u32 2475754826, %v361
      %v368 = vshrl.u32 2131351028, %v362
      %v369 = vor.u32 %v367, %v368
      %v370 = vshll.u32 2131351028, %v361
      %v371 = vshrl.u32 2102212464, %v362
      %v372 = vor.u32 %v370, %v371
      %v373 = vshll.u32 2102212464, %v361
      %v374 = vshrl.u32 920167782, %v362
      %v375 = vor.u32 %v373, %v374
      %v376 = vshll.u32 920167782, %v361
      %v377 = vshrl.u32 1326507024, %v362
      %v378 = vor.u32 %v376, %v377
      %vm379 = vcmp.lt.s32.totalorder %v360, 1
      %vm380 = vcmp.lt.s32.totalorder %v360, 2
      %vm381 = vcmp.lt.s32.totalorder %v360, 3
      %vm382 = vcmp.lt.s32.totalorder %v360, 4
      %v383 = vsel %vm379, %v363, %v366
      %v384 = vsel %vm382, %v372, 2102212464
      %v385 = vsel %vm381, %v369, %v384
      %v386 = vsel %vm380, %v383, %v385
      %v387 = vsel %vm379, %v366, %v369
      %v388 = vsel %vm382, %v375, 920167782
      %v389 = vsel %vm381, %v372, %v388
      %v390 = vsel %vm380, %v387, %v389
      %v391 = vsel %vm379, %v369, %v372
      %v392 = vsel %vm382, %v378, 1326507024
      %v393 = vsel %vm381, %v375, %v392
      %v394 = vsel %vm380, %v391, %v393
      %v395 = vshll.u32 %v355, 8
      %v396 = vmul.u32.u64.compose %v395, %v394
      %v397 = vextract.low.u32 %v396
      %v398 = vextract.high.u32 %v396
      %v399 = vmul.u32.u64.compose %v395, %v390
      %v400 = vextract.low.u32 %v399
      %v401 = vextract.high.u32 %v399
      %v402 = vmul.u32 %v395, %v386
      %v403 = vadd.s32 %v398, %v400
      %vm404 = vc.u32 %v398, %v400
      %v405 = vadd.s32 %v401, 1
      %v406 = vsel %vm404, %v405, %v401
      %v407 = vadd.s32 %v402, %v406
      %v408 = vadd.s32 %v407, 536870912
      %v409 = vshrl.u32 %v408, 30
      %v410 = vshll.u32 %v409, 30
      %v411 = vsub.s32 %v407, %v410
      %vm412 = vcmp.lt.s32.totalorder %v411, 0
      %v413 = vsub.s32 0, %v411
      %v414 = vsel %vm412, %v413, %v411
      %v415 = vclz %v414
      %v416 = vsub.s32 %v415, 2
      %vm417 = vcmp.gt.s32.totalorder 0, %v416
      %v418 = vsel %vm417, 0, %v416
      %v419 = vsub.s32 32, %v418
      %v420 = vshll.u32 %v411, %v418
      %v421 = vshrl.u32 %v403, %v419
      %v422 = vor.u32 %v420, %v421
      %v423 = vsub.s32 4294967266, %v418
      %v424 = vadd.s32 %v423, 127
      %v425 = vshll.u32 %v424, 23
      %v426 = vor.u32 4788187, %v425
      %v427 = vand.u32 2147483647, %v426
      %v429 = vcvt.s32.f32 %v422
      %v430 = vmul.f32 %v429, %v427
      %v431 = vxor.u32 %v430, 2147483648
      %v432 = vsel %vm349, %v431, %v430
      %v433 = vsub.s32 4, %v409
      %v434 = vsel %vm349, %v433, %v409
      %v435 = vsel %vm348, %v243, %v432
      %v436 = vsel %vm348, 0, %v434
      %v437 = vcosq.f32.pop %v435
      %v438 = vsinq.f32.pop %v435
      %vm439 = vweird.f32 %v243
      %v440 = vand.u32 %v436, 3
      %vm441 = vcmp.lt.s32.totalorder %v440, 2
      %vm442 = vcmp.eq.s32.totalorder %v440, 0
      %v443 = vxor.u32 %v438, 2147483648
      %v444 = vsel %vm442, %v437, %v443
      %vm445 = vcmp.eq.s32.totalorder %v440, 2
      %v446 = vxor.u32 %v437, 2147483648
      %v447 = vsel %vm445, %v446, %v438
      %v448 = vsel %vm441, %v444, %v447
      %v449 = vsel %vm439, nan, %v448
      %v450 = vmul.f32 %v240, %v346
      %v451 = vmul.f32 %v241, %v449
      %vm452 = vcmask 64512
      %453 = vst.msk [vmem:[#allocation2] sm:$0xff] %vm452, %v450
      %vm454 = vcmask 57344
      %455 = vst.msk [vmem:[#allocation2 + $0x8] sm:$0x1] %vm454, %v451
      %v456 = vand.u32 2147483647, %v242
      %vm457 = vcmp.le.f32.partialorder %v456, 0.7853982
      %vm458 = vcmp.lt.s32.totalorder %v242, 0
      %v459 = vand.u32 %v242, 2139095040
      %v460 = vshrl.u32 %v459, 23
      %v461 = vsub.s32 %v460, 127
      %v462 = vand.u32 2147483647, %v242
      %v463 = vand.u32 %v462, 8388607
      %v464 = vor.u32 %v463, 8388608
      %v465 = vsub.s32 0, %v464
      %v466 = vadd.s32 %v461, 1
      %vm467 = vcmp.gt.s32.totalorder %v466, 0
      %v468 = vsel %vm467, %v466, 0
      %v469 = vshrl.u32 %v468, 5
      %v470 = vand.u32 %v468, 31
      %v471 = vsub.s32 32, %v470
      %v472 = vshrl.u32 683565275, %v471
      %v473 = vshll.u32 683565275, %v470
      %v474 = vshrl.u32 2475754826, %v471
      %v475 = vor.u32 %v473, %v474
      %v476 = vshll.u32 2475754826, %v470
      %v477 = vshrl.u32 2131351028, %v471
      %v478 = vor.u32 %v476, %v477
      %v479 = vshll.u32 2131351028, %v470
      %v480 = vshrl.u32 2102212464, %v471
      %v481 = vor.u32 %v479, %v480
      %v482 = vshll.u32 2102212464, %v470
      %v483 = vshrl.u32 920167782, %v471
      %v484 = vor.u32 %v482, %v483
      %v485 = vshll.u32 920167782, %v470
      %v486 = vshrl.u32 1326507024, %v471
      %v487 = vor.u32 %v485, %v486
      %vm488 = vcmp.lt.s32.totalorder %v469, 1
      %vm489 = vcmp.lt.s32.totalorder %v469, 2
      %vm490 = vcmp.lt.s32.totalorder %v469, 3
      %vm491 = vcmp.lt.s32.totalorder %v469, 4
      %v492 = vsel %vm488, %v472, %v475
      %v493 = vsel %vm491, %v481, 2102212464
      %v494 = vsel %vm490, %v478, %v493
      %v495 = vsel %vm489, %v492, %v494
      %v496 = vsel %vm488, %v475, %v478
      %v497 = vsel %vm491, %v484, 920167782
      %v498 = vsel %vm490, %v481, %v497
      %v499 = vsel %vm489, %v496, %v498
      %v500 = vsel %vm488, %v478, %v481
      %v501 = vsel %vm491, %v487, 1326507024
      %v502 = vsel %vm490, %v484, %v501
      %v503 = vsel %vm489, %v500, %v502
      %v504 = vshll.u32 %v464, 8
      %v505 = vmul.u32.u64.compose %v504, %v503
      %v506 = vextract.low.u32 %v505
      %v507 = vextract.high.u32 %v505
      %v508 = vmul.u32.u64.compose %v504, %v499
      %v509 = vextract.low.u32 %v508
      %v510 = vextract.high.u32 %v508
      %v511 = vmul.u32 %v504, %v495
      %v512 = vadd.s32 %v507, %v509
      %vm513 = vc.u32 %v507, %v509
      %v514 = vadd.s32 %v510, 1
      %v515 = vsel %vm513, %v514, %v510
      %v516 = vadd.s32 %v511, %v515
      %v517 = vadd.s32 %v516, 536870912
      %v518 = vshrl.u32 %v517, 30
      %v519 = vshll.u32 %v518, 30
      %v520 = vsub.s32 %v516, %v519
      %vm521 = vcmp.lt.s32.totalorder %v520, 0
      %v522 = vsub.s32 0, %v520
      %v523 = vsel %vm521, %v522, %v520
      %v524 = vclz %v523
      %v525 = vsub.s32 %v524, 2
      %vm526 = vcmp.gt.s32.totalorder 0, %v525
      %v527 = vsel %vm526, 0, %v525
      %v528 = vsub.s32 32, %v527
      %v529 = vshll.u32 %v520, %v527
      %v530 = vshrl.u32 %v512, %v528
      %v531 = vor.u32 %v529, %v530
      %v532 = vsub.s32 4294967266, %v527
      %v533 = vadd.s32 %v532, 127
      %v534 = vshll.u32 %v533, 23
      %v535 = vor.u32 4788187, %v534
      %v536 = vand.u32 2147483647, %v535
      %v538 = vcvt.s32.f32 %v531
      %v539 = vmul.f32 %v538, %v536
      %v540 = vxor.u32 %v539, 2147483648
      %v541 = vsel %vm458, %v540, %v539
      %v542 = vsub.s32 4, %v518
      %v543 = vsel %vm458, %v542, %v518
      %v544 = vsel %vm457, %v242, %v541
      %v545 = vsel %vm457, 0, %v543
      %v546 = vcosq.f32.pop %v544
      %v547 = vsinq.f32.pop %v544
      %vm548 = vweird.f32 %v242
      %v549 = vadd.s32 %v545, 3
      %v550 = vand.u32 %v549, 3
      %vm551 = vcmp.lt.s32.totalorder %v550, 2
      %vm552 = vcmp.eq.s32.totalorder %v550, 0
      %v553 = vxor.u32 %v547, 2147483648
      %v554 = vsel %vm552, %v546, %v553
      %vm555 = vcmp.eq.s32.totalorder %v550, 2
      %v556 = vxor.u32 %v546, 2147483648
      %v557 = vsel %vm555, %v556, %v547
      %v558 = vsel %vm551, %v554, %v557
      %v559 = vsel %vm548, nan, %v558
      %v560 = vand.u32 2147483647, %v243
      %vm561 = vcmp.le.f32.partialorder %v560, 0.7853982
      %vm562 = vcmp.lt.s32.totalorder %v243, 0
      %v563 = vand.u32 %v243, 2139095040
      %v564 = vshrl.u32 %v563, 23
      %v565 = vsub.s32 %v564, 127
      %v566 = vand.u32 2147483647, %v243
      %v567 = vand.u32 %v566, 8388607
      %v568 = vor.u32 %v567, 8388608
      %v569 = vsub.s32 0, %v568
      %v570 = vadd.s32 %v565, 1
      %vm571 = vcmp.gt.s32.totalorder %v570, 0
      %v572 = vsel %vm571, %v570, 0
      %v573 = vshrl.u32 %v572, 5
      %v574 = vand.u32 %v572, 31
      %v575 = vsub.s32 32, %v574
      %v576 = vshrl.u32 683565275, %v575
      %v577 = vshll.u32 683565275, %v574
      %v578 = vshrl.u32 2475754826, %v575
      %v579 = vor.u32 %v577, %v578
      %v580 = vshll.u32 2475754826, %v574
      %v581 = vshrl.u32 2131351028, %v575
      %v582 = vor.u32 %v580, %v581
      %v583 = vshll.u32 2131351028, %v574
      %v584 = vshrl.u32 2102212464, %v575
      %v585 = vor.u32 %v583, %v584
      %v586 = vshll.u32 2102212464, %v574
      %v587 = vshrl.u32 920167782, %v575
      %v588 = vor.u32 %v586, %v587
      %v589 = vshll.u32 920167782, %v574
      %v590 = vshrl.u32 1326507024, %v575
      %v591 = vor.u32 %v589, %v590
      %vm592 = vcmp.lt.s32.totalorder %v573, 1
      %vm593 = vcmp.lt.s32.totalorder %v573, 2
      %vm594 = vcmp.lt.s32.totalorder %v573, 3
      %vm595 = vcmp.lt.s32.totalorder %v573, 4
      %v596 = vsel %vm592, %v576, %v579
      %v597 = vsel %vm595, %v585, 2102212464
      %v598 = vsel %vm594, %v582, %v597
      %v599 = vsel %vm593, %v596, %v598
      %v600 = vsel %vm592, %v579, %v582
      %v601 = vsel %vm595, %v588, 920167782
      %v602 = vsel %vm594, %v585, %v601
      %v603 = vsel %vm593, %v600, %v602
      %v604 = vsel %vm592, %v582, %v585
      %v605 = vsel %vm595, %v591, 1326507024
      %v606 = vsel %vm594, %v588, %v605
      %v607 = vsel %vm593, %v604, %v606
      %v608 = vshll.u32 %v568, 8
      %v609 = vmul.u32.u64.compose %v608, %v607
      %v610 = vextract.low.u32 %v609
      %v611 = vextract.high.u32 %v609
      %v612 = vmul.u32.u64.compose %v608, %v603
      %v613 = vextract.low.u32 %v612
      %v614 = vextract.high.u32 %v612
      %v615 = vmul.u32 %v608, %v599
      %v616 = vadd.s32 %v611, %v613
      %vm617 = vc.u32 %v611, %v613
      %v618 = vadd.s32 %v614, 1
      %v619 = vsel %vm617, %v618, %v614
      %v620 = vadd.s32 %v615, %v619
      %v621 = vadd.s32 %v620, 536870912
      %v622 = vshrl.u32 %v621, 30
      %v623 = vshll.u32 %v622, 30
      %v624 = vsub.s32 %v620, %v623
      %vm625 = vcmp.lt.s32.totalorder %v624, 0
      %v626 = vsub.s32 0, %v624
      %v627 = vsel %vm625, %v626, %v624
      %v628 = vclz %v627
      %v629 = vsub.s32 %v628, 2
      %vm630 = vcmp.gt.s32.totalorder 0, %v629
      %v631 = vsel %vm630, 0, %v629
      %v632 = vsub.s32 32, %v631
      %v633 = vshll.u32 %v624, %v631
      %v634 = vshrl.u32 %v616, %v632
      %v635 = vor.u32 %v633, %v634
      %v636 = vsub.s32 4294967266, %v631
      %v637 = vadd.s32 %v636, 127
      %v638 = vshll.u32 %v637, 23
      %v639 = vor.u32 4788187, %v638
      %v640 = vand.u32 2147483647, %v639
      %v642 = vcvt.s32.f32 %v635
      %v643 = vmul.f32 %v642, %v640
      %v644 = vxor.u32 %v643, 2147483648
      %v645 = vsel %vm562, %v644, %v643
      %v646 = vsub.s32 4, %v622
      %v647 = vsel %vm562, %v646, %v622
      %v648 = vsel %vm561, %v243, %v645
      %v649 = vsel %vm561, 0, %v647
      %v650 = vcosq.f32.pop %v648
      %v651 = vsinq.f32.pop %v648
      %vm652 = vweird.f32 %v243
      %v653 = vadd.s32 %v649, 3
      %v654 = vand.u32 %v653, 3
      %vm655 = vcmp.lt.s32.totalorder %v654, 2
      %vm656 = vcmp.eq.s32.totalorder %v654, 0
      %v657 = vxor.u32 %v651, 2147483648
      %v658 = vsel %vm656, %v650, %v657
      %vm659 = vcmp.eq.s32.totalorder %v654, 2
      %v660 = vxor.u32 %v650, 2147483648
      %v661 = vsel %vm659, %v660, %v651
      %v662 = vsel %vm655, %v658, %v661
      %v663 = vsel %vm652, nan, %v662
      %v664 = vmul.f32 %v240, %v559
      %v665 = vmul.f32 %v241, %v663
      %666 = vst.msk [vmem:[#allocation2 + $0x9] sm:$0xff] %vm452, %v664
      %667 = vst.msk [vmem:[#allocation2 + $0x11] sm:$0x1] %vm454, %v665
      %v668 = vld [vmem:[#allocation2] sm:$0xff]
      %v669 = vld [vmem:[#allocation2 + $0x8] sm:$0xff]
      %v670 = vld [vmem:[#allocation2 + $0x10] sm:$0xff]
      %v671 = vld [vmem:[%s2] sm:$0xff]
      %v672 = vld [vmem:[%s2 + $0x8] sm:$0xff]
      %v673 = vld [vmem:[%s2 + $0x10] sm:$0xff]
      %674 = vxpose.xlu0.b32.start [1/16] %v668, 128
      %675 = vxpose.xlu0.b32.cont [2/16] %v669, 128
      %676 = vxpose.xlu0.b32.cont [3/16] %v670, 128
      %677 = vxpose.xlu0.b32.cont [4/16] 0.0, 128
      %678 = vxpose.xlu0.b32.cont [5/16] 0.0, 128
      %679 = vxpose.xlu0.b32.cont [6/16] 0.0, 128
      %680 = vxpose.xlu0.b32.cont [7/16] 0.0, 128
      %681 = vxpose.xlu0.b32.cont [8/16] 0.0, 128
      %682 = vxpose.xlu0.b32.cont [9/16] 0.0, 128
      %683 = vxpose.xlu0.b32.cont [10/16] 0.0, 128
      %684 = vxpose.xlu0.b32.cont [11/16] 0.0, 128
      %685 = vxpose.xlu0.b32.cont [12/16] 0.0, 128
      %686 = vxpose.xlu0.b32.cont [13/16] 0.0, 128
      %687 = vxpose.xlu0.b32.cont [14/16] 0.0, 128
      %688 = vxpose.xlu0.b32.cont [15/16] 0.0, 128
      %689 = vxpose.xlu0.b32.end [16/16] 0.0, 128
      %v690 = vpop.trf.xlu0
      %v691 = vpop.trf.xlu0
      %v692 = vpop.trf.xlu0
      %v693 = vpop.trf.xlu0
      %v694 = vpop.trf.xlu0
      %v695 = vpop.trf.xlu0
      %v696 = vpop.trf.xlu0
      %v697 = vpop.trf.xlu0
      %v698 = vpop.trf.xlu0
      %v699 = vpop.trf.xlu0
      %v700 = vpop.trf.xlu0
      %v701 = vpop.trf.xlu0
      %v702 = vpop.trf.xlu0
      %v703 = vpop.trf.xlu0
      %v704 = vpop.trf.xlu0
      %v705 = vpop.trf.xlu0
      %vm706 = vcmask 195584
      %v708 = vsel %vm706, %v690, 0
      %710 = vmatprep.subr.mxu0 0.0
      %711 = vmatpush1.msra.mxu0 %v671
      %712 = vmatprep.subr.mxu0 0.0
      %713 = vmatpush1.msra.mxu0 %v672
      %714 = vmatprep.subr.mxu0 0.0
      %715 = vmatpush1.msra.mxu0 %v673
      %716 = vmatprep.subr.mxu0 0.0
      %717 = vmatpush1.msra.mxu0 0.0
      %718 = vmatprep.subr.mxu0 0.0
      %719 = vmatpush1.msra.mxu0 0.0
      %720 = vmatprep.subr.mxu0 0.0
      %721 = vmatpush1.msra.mxu0 0.0
      %722 = vmatprep.subr.mxu0 0.0
      %723 = vmatpush1.msra.mxu0 0.0
      %724 = vmatprep.subr.mxu0 0.0
      %725 = vmatpush1.msra.mxu0 0.0
      %726 = vmatprep.subr.mxu0 0.0
      %727 = vmatpush1.msra.mxu0 0.0
      %728 = vmatprep.subr.mxu0 0.0
      %729 = vmatpush1.msra.mxu0 0.0
      %730 = vmatprep.subr.mxu0 0.0
      %731 = vmatpush1.msra.mxu0 0.0
      %732 = vmatprep.subr.mxu0 0.0
      %733 = vmatpush1.msra.mxu0 0.0
      %734 = vmatprep.subr.mxu0 0.0
      %735 = vmatpush1.msra.mxu0 0.0
      %736 = vmatprep.subr.mxu0 0.0
      %737 = vmatpush1.msra.mxu0 0.0
      %738 = vmatprep.subr.mxu0 0.0
      %739 = vmatpush1.msra.mxu0 0.0
      %740 = vmatprep.subr.mxu0 0.0
      %741 = vmatpush1.msra.mxu0 0.0
      %742 = vmatprep.subr.mxu0 0.0
      %743 = vmatpush1.msra.mxu0 0.0
      %744 = vmatprep.subr.mxu0 0.0
      %745 = vmatpush1.msra.mxu0 0.0
      %746 = vmatprep.subr.mxu0 0.0
      %747 = vmatpush1.msra.mxu0 0.0
      %748 = vmatprep.subr.mxu0 0.0
      %749 = vmatpush1.msra.mxu0 0.0
      %750 = vmatprep.subr.mxu0 0.0
      %751 = vmatpush1.msra.mxu0 0.0
      %752 = vmatprep.subr.mxu0 0.0
      %753 = vmatpush1.msra.mxu0 0.0
      %754 = vmatprep.subr.mxu0 0.0
      %755 = vmatpush1.msra.mxu0 0.0
      %756 = vmatprep.subr.mxu0 0.0
      %757 = vmatpush1.msra.mxu0 0.0
      %758 = vmatprep.subr.mxu0 0.0
      %759 = vmatpush1.msra.mxu0 0.0
      %760 = vmatprep.subr.mxu0 0.0
      %761 = vmatpush1.msra.mxu0 0.0
      %762 = vmatprep.subr.mxu0 0.0
      %763 = vmatpush1.msra.mxu0 0.0
      %764 = vmatprep.subr.mxu0 0.0
      %765 = vmatpush1.msra.mxu0 0.0
      %766 = vmatprep.subr.mxu0 0.0
      %767 = vmatpush1.msra.mxu0 0.0
      %768 = vmatprep.subr.mxu0 0.0
      %769 = vmatpush1.msra.mxu0 0.0
      %770 = vmatprep.subr.mxu0 0.0
      %771 = vmatpush1.msra.mxu0 0.0
      %772 = vmatprep.subr.mxu0 0.0
      %773 = vmatpush1.msra.mxu0 0.0
      %774 = vmatprep.mubr.f32.mxu0 0.0
      %775 = vmatmul.mubr.f32.gmra.mrb[0].mxu0 %v708
      %v776 = vpop.f32.mrb[0].mxu0
      %v777 = vadd.f32 0.0, %v776
      %v778 = vpop.f32.mrb[0].mxu0
      %779 = vdwg.mxu0
      %s780 = smul.u32 %s19, 8
      %s781 = scalar_lea.vmem %s224, %s780
      %v782 = vld [vmem:[%s781] sm:$0xff]
      %v783 = vadd.f32 %v782, %v777
      %784 = vst.msk [vmem:[%s781] sm:$0xff] %vm452, %v783
      %s785 = sadd.s32 %s780, 1
      %s786 = scalar_lea.vmem %s224, %s785
      %v787 = vld [vmem:[%s786] sm:$0xff]
      %789 = vrot.lane.b32.xlu0 %v777, 120
      %v790 = vpop.permute.xlu0 %789
      %v792 = vadd.f32 %v787, %v790
      %793 = vst.msk [vmem:[%s786] sm:$0xff] %vm452, %v792
      %p794 = scmp.lt.s32.totalorder %s18, 1
      %s795 = scalar_select %p794, %s18, 1
      %s796 = smul.addr %s795, 2
      %s797 = smul.addr %s796, 8
      %s798 = scalar_lea.vmem %s3, %s797
      // Predicated region
      $region41: #{tpu_custom_call.1} parent=31 // pred_check
        %p799 = pneg %p121
      $region42: #{tpu_custom_call.1} parent=31 // pred_check_branch
        %801 = sbr.rel (%p799) target = $region44
      $region43: #{tpu_custom_call.1} parent=31 // pred_region
        _
      $region44: #{tpu_custom_call.1} parent=31 // pred_fallthru
        _
    $region32: #{tpu_custom_call.1} parent=5 // pred_fallthru
      _
    %p802 = scmp.le.s32.totalorder 2, %s9
    // Predicated region
    $region45: #{tpu_custom_call.1} parent=5 // pred_check
      %p803 = pneg %p802
    $region46: #{tpu_custom_call.1} parent=5 // pred_check_branch
      %805 = sbr.rel (%p803) target = $region48
    $region47: #{tpu_custom_call.1} parent=5 // pred_region
      %s806 = ssub.s32 %s9, 2
      // Predicated region
      $region49: #{tpu_custom_call.1} parent=47 // pred_check
        %p807 = pneg %p127
      $region50: #{tpu_custom_call.1} parent=47 // pred_check_branch
        %809 = sbr.rel (%p807) target = $region52
      $region51: #{tpu_custom_call.1} parent=47 // pred_region
        %p810 = scmp.lt.s32.totalorder %s20, 1
        %s811 = scalar_select %p810, %s20, 1
        %s812 = smul.addr %s811, 2
        %s813 = smul.addr %s812, 8
        %s814 = scalar_lea.vmem %s3, %s813
      $region52: #{tpu_custom_call.1} parent=47 // pred_fallthru
        _
    $region48: #{tpu_custom_call.1} parent=5 // pred_fallthru
      _
  $region6: #{tpu_custom_call.1} parent=0 // loop_footer
    %s13 = sadd.s32 1, %s9
  $region7: #{tpu_custom_call.1} parent=0 // loop_footer_branch
    %8 = sbr.rel target = $region3
  $region8: #{tpu_custom_call.1} parent=0 // loop_exit
    _

</llo_original>
